<compile_context>
chip_gen: v7x
topology: tpu7x:2x2x1
jax: 0.10.0
libtpu: 0.0.40
codegen_flags: <defaults>
</compile_context>

<pallas_src>
import functools

import jax
import jax.numpy as jnp
from jax.experimental import pallas as pl
from jax.experimental.pallas import tpu as pltpu


LANE = 128


def _round_up(x, m):
    return ((x + m - 1) // m) * m


def _cdiv(a, b):
    return (a + b - 1) // b


def _fm_kernel(emb_u_ref, emb_i_ref, lin_ref, out_ref):
    # emb_{u,i}_ref : [D, TB]   (embedding dim on sublanes, batch on lanes)
    # lin_ref / out_ref : [1, TB]  (lane-dense)
    #
    # Keep the reduce on VPU + sublane reduce; kernel is HBM-bound, MXU
    # offload would only add latency.  Multiply in the native table dtype,
    # accumulate in f32.
    prod = emb_u_ref[...] * emb_i_ref[...]
    fm = jnp.sum(prod.astype(jnp.float32), axis=0, keepdims=True)   # [1, TB]
    out_ref[...] = lin_ref[...] + fm


def _batch_tile(B, D, itemsize):
    """Pick (TB, B_pad).

    Big tiles amortize the ~0.35 us/step pipeline overhead; the VMEM budget
    keeps the double-buffered footprint under v5e's 16 MiB scoped default
    (the smallest of v5e/v6e/v7x); the near-even split keeps tail padding to
    at most ~128 lanes per tile instead of up to TB-128.
    """
    # Dominant VMEM term: 2 embedding inputs x 2 pipeline buffers x D x TB.
    vmem_budget = 12 * 1024 * 1024
    tb_from_vmem = vmem_budget // max(1, 2 * 2 * D * itemsize)
    tb_cap = max(LANE, min(16384, (tb_from_vmem // LANE) * LANE))

    b_lane = _round_up(B, LANE)
    if b_lane <= tb_cap:
        return b_lane, b_lane                       # single tile, minimal padding
    n_tiles = _cdiv(b_lane, tb_cap)
    tb = _round_up(_cdiv(b_lane, n_tiles), LANE)    # near-even split, <= tb_cap
    return tb, n_tiles * tb


def _batch_dim_semantics():
    """v7x has 2 TensorCores per chip: split batch tiles across both cores.
    On 1-TC v5e/v6e plain 'parallel' is a no-op and always compiles."""
    try:
        kind = jax.devices()[0].device_kind.lower()
    except Exception:
        kind = ""
    if "v7" in kind:
        return (pltpu.CORE_PARALLEL,)
    return ("parallel",)


@functools.partial(jax.jit, static_argnames=("user_num",))
def fm_forward(user, item, emb_table, lin_table, bias, *, user_num):
    """FM forward. user, item: int32 [B]. Returns logits of shape [B]."""
    B = user.shape[0]
    D = emb_table.shape[1]
    itemsize = jnp.dtype(emb_table.dtype).itemsize

    TB, B_pad = _batch_tile(B, D, itemsize)
    pad = B_pad - B

    # Pad the (tiny) int32 indices, NOT the gathered [B, D] data.  Padded
    # values are explicitly kept in range (0 for users, user_num for items)
    # so a future switch to in-kernel / DMA gather cannot read OOB.
    idx_u = jnp.pad(user, (0, pad), constant_values=0)
    idx_i = jnp.pad(item, (0, pad), constant_values=0) + user_num  # offsets=[0, user_num]

    # Gather straight into the [D, B_pad] (batch-on-lanes) layout from the
    # transposed table: no [B, D] -> [D, B_pad] transpose pass over the
    # gathered data ever hits HBM.  (In production, store the table as [D, V]
    # once instead of transposing per call.)
    emb_T = emb_table.T                                   # [D, V]
    emb_u_t = jnp.take(emb_T, idx_u, axis=1)              # [D, B_pad]
    emb_i_t = jnp.take(emb_T, idx_i, axis=1)              # [D, B_pad]

    # Linear term folded in the wrapper (fuses with its gather) -> single
    # lane-dense [1, B_pad] row entering the kernel; no per-step bias DMA.
    lin_vec = lin_table[:, 0].astype(jnp.float32)         # [V]
    lin_row = (jnp.take(lin_vec, idx_u) + jnp.take(lin_vec, idx_i)
               + bias[0].astype(jnp.float32)).reshape(1, B_pad)

    # TODO(synk): higher-effort follow-up — move the row gather itself
    # in-kernel (table resident in VMEM + scalar-prefetched indices, or
    # pl.Element row DMAs) to cut embedding HBM traffic to a single pass;
    # kept in XLA here for robust lowering across generations.

    out = pl.pallas_call(
        _fm_kernel,
        out_shape=jax.ShapeDtypeStruct((1, B_pad), jnp.float32),
        grid_spec=pltpu.PrefetchScalarGridSpec(
            num_scalar_prefetch=0,
            grid=(B_pad // TB,),
            in_specs=[
                pl.BlockSpec((D, TB), lambda i: (0, i)),
                pl.BlockSpec((D, TB), lambda i: (0, i)),
                pl.BlockSpec((1, TB), lambda i: (0, i)),
            ],
            out_specs=pl.BlockSpec((1, TB), lambda i: (0, i)),
        ),
        compiler_params=pltpu.CompilerParams(
            dimension_semantics=_batch_dim_semantics(),
            # Explicit scoped-VMEM ceiling: <= v7x's 32 MiB scoped default,
            # comfortably above the <=~9 MiB double-buffered footprint at the
            # derived TB, and raises v5e's 16 MiB default for larger D.
            vmem_limit_bytes=32 * 1024 * 1024,
        ),
    )(emb_u_t, emb_i_t, lin_row)

    return out[0, :B]                                     # squeeze(1)


def fm_reference(user, item, emb_table, lin_table, bias, *, user_num):
    """Pure-JAX reference mirroring the PyTorch module exactly."""
    idx = jnp.stack([user, item + user_num], axis=1)      # [B, 2]
    emb = emb_table[idx]                                  # [B, 2, D]
    lin = jnp.sum(lin_table[idx], axis=1) + bias          # [B, 1]
    square_of_sum = jnp.sum(emb, axis=1) ** 2
    sum_of_square = jnp.sum(emb ** 2, axis=1)
    fm = 0.5 * jnp.sum(square_of_sum - sum_of_square, axis=1, keepdims=True)
    return (lin + fm)[:, 0]


if __name__ == "__main__":
    user_num, item_num, factor_num = 16, 24, 32
    batch = 6

    key = jax.random.PRNGKey(0)
    k_emb, k_lin, k_u, k_i = jax.random.split(key, 4)

    # Deterministic synthetic parameters (shapes per module __init__).
    emb_table = 0.1 * jax.random.normal(
        k_emb, (user_num + item_num, factor_num), dtype=jnp.float32)
    lin_table = 0.1 * jax.random.normal(
        k_lin, (user_num + item_num, 1), dtype=jnp.float32)
    bias = jnp.zeros((1,), dtype=jnp.float32)

    user = jax.random.randint(k_u, (batch,), 0, user_num, dtype=jnp.int32)
    item = jax.random.randint(k_i, (batch,), 0, item_num, dtype=jnp.int32)

    out = fm_forward(user, item, emb_table, lin_table, bias,
                     user_num=user_num)
    out = jax.block_until_ready(out)

    ref = fm_reference(user, item, emb_table, lin_table, bias,
                       user_num=user_num)
    assert out.shape == (batch,)
    assert jnp.allclose(out, ref, atol=1e-5, rtol=1e-5), (out, ref)

    print("KERNEL_OK")
</pallas_src>

<mosaic_0001>
module attributes {stable_mosaic.version = 11 : i64} {
  func.func @_fm_kernel(%arg0: i32, %arg1: memref<32x128xf32, #tpu.memory_space<vmem>>, %arg2: memref<32x128xf32, #tpu.memory_space<vmem>>, %arg3: memref<1x128xf32, #tpu.memory_space<vmem>>, %arg4: memref<1x128xf32, #tpu.memory_space<vmem>>) attributes {dimension_semantics = [#tpu.dimension_semantics<parallel>], iteration_bounds = array<i64: 1>, scalar_prefetch = 0 : i64, scratch_operands = 0 : i64, tpu.core_type = #tpu.core_type<tc>, window_params = [{transform_indices = @transform_0, window_bounds = array<i64: 32, 128>}, {transform_indices = @transform_1, window_bounds = array<i64: 32, 128>}, {transform_indices = @transform_2, window_bounds = array<i64: 1, 128>}, {transform_indices = @transform_3, window_bounds = array<i64: 1, 128>}]} {
    %c0 = arith.constant 0 : index
    %c0_0 = arith.constant 0 : index
    %0 = vector.load %arg1[%c0, %c0_0] : memref<32x128xf32, #tpu.memory_space<vmem>>, vector<32x128xf32>
    %c0_1 = arith.constant 0 : index
    %c0_2 = arith.constant 0 : index
    %1 = vector.load %arg2[%c0_1, %c0_2] : memref<32x128xf32, #tpu.memory_space<vmem>>, vector<32x128xf32>
    %2 = arith.mulf %0, %1 : vector<32x128xf32>
    %cst = arith.constant dense<0.000000e+00> : vector<128xf32>
    %3 = vector.multi_reduction <add>, %2, %cst [0] : vector<32x128xf32> to vector<128xf32>
    %4 = vector.shape_cast %3 : vector<128xf32> to vector<1x128xf32>
    %c0_3 = arith.constant 0 : index
    %c0_4 = arith.constant 0 : index
    %5 = vector.load %arg3[%c0_3, %c0_4] : memref<1x128xf32, #tpu.memory_space<vmem>>, vector<1x128xf32>
    %6 = arith.addf %5, %4 : vector<1x128xf32>
    %c0_5 = arith.constant 0 : index
    %c0_6 = arith.constant 0 : index
    %7 = vector.load %arg4[%c0_5, %c0_6] : memref<1x128xf32, #tpu.memory_space<vmem>>, vector<1x128xf32>
    tpu.vector_store %arg4[%c0_5, %c0_6], %6 {strides = array<i32>} : memref<1x128xf32, #tpu.memory_space<vmem>>, vector<1x128xf32>,
    return
  }
  func.func @transform_0(%arg0: i32) -> (i32, i32) {
    %c0_i32 = arith.constant 0 : i32
    %c0_i32_0 = arith.constant 0 : i32
    return %c0_i32, %arg0 : i32, i32
  }
  func.func @transform_1(%arg0: i32) -> (i32, i32) {
    %c0_i32 = arith.constant 0 : i32
    %c0_i32_0 = arith.constant 0 : i32
    return %c0_i32, %arg0 : i32, i32
  }
  func.func @transform_2(%arg0: i32) -> (i32, i32) {
    %c0_i32 = arith.constant 0 : i32
    %c0_i32_0 = arith.constant 0 : i32
    return %c0_i32, %arg0 : i32, i32
  }
  func.func @transform_3(%arg0: i32) -> (i32, i32) {
    %c0_i32 = arith.constant 0 : i32
    %c0_i32_0 = arith.constant 0 : i32
    return %c0_i32, %arg0 : i32, i32
  }
}

</mosaic_0001>

<llo_original>
// kernel: fm_forward.1
$region0: #{fm_forward.1}
  #allocation0 [shape = 'u32[]', space=smem, size = 0x4, offset = 0x4, fixed_abs, tag = 'smem constant byte address 0x4 - core index']
  #allocation1 [shape = 'u32[144,128]{1,0:T(1,128)}', space=vmem, size = 0x12000, scoped, tag = 'internal scratch']
  %s0 = inlined_call_operand.vmem [shape: f32[32,128], index: 0, kind: input, shape index: {}]
  %s1 = inlined_call_operand.vmem [shape: f32[32,128], index: 1, kind: input, shape index: {}]
  %s2 = inlined_call_operand.vmem [shape: f32[1,128], index: 2, kind: input, shape index: {}]
  %s3 = inlined_call_operand.vmem [shape: f32[1,128], index: 3, kind: output, shape index: {}]
  %s4 = sld [smem:[#allocation0]]
  $region22: #{fm_forward.1} parent=0
    _
  %s6 = ssub.s32 1, %s4
  %s7 = scalar_select 0, %s6, %s4
  // Predicated region
  $region2: #{fm_forward.1} parent=0 // pred_check
    _
  $region3: #{fm_forward.1} parent=0 // pred_check_branch
    %9 = sbr.rel (0) target = $region5
  $region4: #{fm_forward.1} parent=0 // pred_region
    _
  $region5: #{fm_forward.1} parent=0 // pred_fallthru
    _
  // Predicated region
  $region6: #{fm_forward.1} parent=0 // pred_check
    _
  $region7: #{fm_forward.1} parent=0 // pred_check_branch
    %11 = sbr.rel (0) target = $region9
  $region8: #{fm_forward.1} parent=0 // pred_region
    _
  $region9: #{fm_forward.1} parent=0 // pred_fallthru
    _
  // Predicated region
  $region10: #{fm_forward.1} parent=0 // pred_check
    _
  $region11: #{fm_forward.1} parent=0 // pred_check_branch
    %13 = sbr.rel (0) target = $region13
  $region12: #{fm_forward.1} parent=0 // pred_region
    _
  $region13: #{fm_forward.1} parent=0 // pred_fallthru
    _
  %v14 = vld [vmem:[%s0] sm:$0xff]
  %v15 = vld [vmem:[%s0 + $0x8] sm:$0xff]
  %v16 = vld [vmem:[%s0 + $0x10] sm:$0xff]
  %v17 = vld [vmem:[%s0 + $0x18] sm:$0xff]
  %v18 = vld [vmem:[%s1] sm:$0xff]
  %v19 = vld [vmem:[%s1 + $0x8] sm:$0xff]
  %v20 = vld [vmem:[%s1 + $0x10] sm:$0xff]
  %v21 = vld [vmem:[%s1 + $0x18] sm:$0xff]
  %v22 = vmul.f32 %v14, %v18
  %v23 = vmul.f32 %v15, %v19
  %v24 = vmul.f32 %v16, %v20
  %v25 = vmul.f32 %v17, %v21
  %v26 = vadd.f32 %v22, %v23
  %v27 = vadd.f32 %v26, %v24
  %v28 = vadd.f32 %v27, %v25
  %v29 = vrot.slane %v28, 4
  %v30 = vadd.f32 %v28, %v29
  %v31 = vrot.slane %v30, 2
  %v32 = vadd.f32 %v30, %v31
  %v33 = vrot.slane %v32, 1
  %v34 = vadd.f32 %v32, %v33
  %v35 = vld [vmem:[%s2] sm:$0x1]
  %v36 = vadd.f32 %v35, %v34
  %37 = vst [vmem:[%s3] sm:$0x1] %v36
  // Predicated region
  $region14: #{fm_forward.1} parent=0 // pred_check
    _
  $region15: #{fm_forward.1} parent=0 // pred_check_branch
    %39 = sbr.rel (0) target = $region17
  $region16: #{fm_forward.1} parent=0 // pred_region
    _
  $region17: #{fm_forward.1} parent=0 // pred_fallthru
    _
  // Predicated region
  $region18: #{fm_forward.1} parent=0 // pred_check
    _
  $region19: #{fm_forward.1} parent=0 // pred_check_branch
    %41 = sbr.rel (0) target = $region21
  $region20: #{fm_forward.1} parent=0 // pred_region
    _
  $region21: #{fm_forward.1} parent=0 // pred_fallthru
    _

</llo_original>
